<compile_context>
chip_gen: v5e
topology: v5e:2x2
jax: 0.10.0
libtpu: 0.0.40
codegen_flags: <defaults>
</compile_context>

<pallas_src>
import functools

import jax
import jax.numpy as jnp
from jax import lax
from jax.experimental import pallas as pl
from jax.experimental.pallas import tpu as pltpu


def _round_up(a, m):
    return (a + m - 1) // m * m


def _physical_vmem_bytes():
    """Best-effort physical VMEM query; conservative (v7x-sized) fallback."""
    try:
        info = pltpu.get_tpu_info()
        cap = getattr(info, "vmem_capacity_bytes", None)
        if cap:
            return int(cap)
    except Exception:
        pass
    return 64 * 2 ** 20


def lin_layer_kernel(x_ref, w_ref, b_ref, o_ref, *scratch, leak, sub, maxv):
    """One (i, j, k) grid step of o = GeneralRelu(x @ W_t + b).

    x_ref: (tm, tk)   activation tile
    w_ref: (tk, tn)   weight tile, pre-transposed to MXU-native (K, N) layout
    b_ref: (1,  tn)   bias tile (f32)
    o_ref: (tm, tn)   output tile (VMEM-resident across the k axis)
    scratch: optional (tm, tn) f32 accumulator; absent when the output dtype
             is f32 (then the accumulation happens directly in o_ref).
    """
    acc_ref = scratch[0] if scratch else o_ref
    k = pl.program_id(2)

    # Fold the bias into the accumulator init so the K loop is pure MXU work.
    @pl.when(k == 0)
    def _():
        acc_ref[...] = jnp.broadcast_to(
            b_ref[...].astype(jnp.float32), acc_ref.shape)

    # (tm, tk) @ (tk, tn): contracts the RHS major dim -> native MXU feed.
    acc_ref[...] += jnp.dot(x_ref[...], w_ref[...],
                            preferred_element_type=jnp.float32)

    # Epilogue: GeneralRelu(leak, sub, maxv), specialized at trace time,
    # single lane-dense store.
    @pl.when(k == pl.num_programs(2) - 1)
    def _():
        acc = acc_ref[...]
        if leak is not None and leak != 0.0:
            acc = jnp.where(acc >= 0, acc, acc * jnp.float32(leak))
        else:
            # leak is None (F.relu) or 0.0 (leaky_relu with slope 0) -> ReLU.
            acc = jnp.maximum(acc, jnp.float32(0.0))
        if sub is not None and sub != 0.0:
            acc = acc - jnp.float32(sub)
        if maxv is not None:
            acc = jnp.minimum(acc, jnp.float32(maxv))
        o_ref[...] = acc.astype(o_ref.dtype)


def lin_layer(x, weight, bias, *, leak=0.0, sub=0.0, maxv=None,
              mxu_dtype=None, tm=None, tn=None, tk=None):
    """Pallas TPU LinLayer forward.

    x:      (B, F_in)       activations
    weight: (F_out, F_in)   PyTorch nn.Linear convention
    bias:   (F_out,)
    mxu_dtype: optionally cast matmul operands (e.g. jnp.bfloat16) for the
               native MXU path; accumulation and epilogue stay f32.
    tm/tn/tk: tile sizes; None -> auto-selected per TPU generation.
    """
    B, F_in = x.shape
    F_out, F_in_w = weight.shape
    assert F_in_w == F_in, "weight must be (F_out, F_in)"
    out_dtype = x.dtype

    op_dtype = jnp.dtype(mxu_dtype) if mxu_dtype is not None else jnp.dtype(x.dtype)
    xb = op_dtype.itemsize
    wb = (jnp.dtype(mxu_dtype) if mxu_dtype is not None
          else jnp.dtype(weight.dtype)).itemsize
    ob = jnp.dtype(out_dtype).itemsize

    # f32 outputs accumulate directly in the VMEM-resident output tile.
    acc_in_out = (jnp.dtype(out_dtype) == jnp.dtype(jnp.float32))

    # ---- Per-generation tile defaults and VMEM budget ------------------
    phys_vmem = _physical_vmem_bytes()
    if phys_vmem >= 100 * 2 ** 20:            # v5e / v6e: 128 MiB physical
        vmem_cap = 100 * 2 ** 20
        atm, atn, atk = 512, 512, 2048
        if B >= 2048 and F_out >= 2048:       # large layers -> bigger output tiles
            atm, atn = 1024, 1024
    else:                                      # v7x: 64 MiB physical
        vmem_cap = min(phys_vmem * 3 // 4, 48 * 2 ** 20)
        atm, atn, atk = 512, 512, 1024
    tm = atm if tm is None else tm
    tn = atn if tn is None else tn
    tk = atk if tk is None else tk

    # Clamp tiles to the (8, 128)-aligned problem size.
    tm = min(tm, _round_up(B, 8))
    tn = min(tn, _round_up(F_out, 128))
    tk = min(tk, _round_up(F_in, 128))

    def vmem_need(tm_, tn_, tk_):
        # double-buffered x/W/bias/out tiles (+ f32 acc scratch if present)
        return (2 * (tm_ * tk_ * xb + tk_ * tn_ * wb + 8 * tn_ * 4
                     + tm_ * tn_ * ob)
                + (0 if acc_in_out else tm_ * tn_ * 4))

    budget = vmem_cap - 4 * 2 ** 20
    while vmem_need(tm, tn, tk) > budget and tk > 128:
        tk = max(128, tk // 2)
    while vmem_need(tm, tn, tk) > budget and (tm > 8 or tn > 128):
        if tm >= tn and tm > 8:
            tm = max(8, tm // 2)
        elif tn > 128:
            tn = max(128, tn // 2)
        else:
            break

    M = _round_up(B, tm)
    N = _round_up(F_out, tn)   # lane-dense output (multiple of 128)
    K = _round_up(F_in, tk)

    # Megacore (v7x has 2 TCs): make sure a "parallel" axis has >= 2 blocks.
    if (M // tm) * (N // tn) == 1 and tn % 256 == 0:
        tn //= 2

    # ---- Host-side prep: one producer per operand (cast + pad fused),
    # skipped entirely when already aligned; weight is pre-transposed to the
    # MXU-native (K, N) layout inside the same producer. -------------------
    def prep(a, pads, dt):
        if dt is not None and a.dtype != jnp.dtype(dt):
            a = a.astype(dt)
        if any(p[1] for p in pads):
            a = jnp.pad(a, pads)
        return a

    x_p = prep(x, ((0, M - B), (0, K - F_in)), mxu_dtype)
    w_p = prep(weight.T, ((0, K - F_in), (0, N - F_out)), mxu_dtype)
    b_p = prep(bias.reshape(1, F_out), ((0, 0), (0, N - F_out)), jnp.float32)

    cost = pl.CostEstimate(
        flops=2 * M * N * K,
        transcendentals=0,
        bytes_accessed=M * K * xb + K * N * wb + N * 4 + M * N * ob)

    grid = (M // tm, N // tn, K // tk)
    kernel = functools.partial(lin_layer_kernel, leak=leak, sub=sub, maxv=maxv)
    scratch_shapes = [] if acc_in_out else [pltpu.VMEM((tm, tn), jnp.float32)]

    vmem_limit = int(min(vmem_cap,
                         max(vmem_need(tm, tn, tk) + 4 * 2 ** 20, 16 * 2 ** 20)))

    out_p = pl.pallas_call(
        kernel,
        out_shape=jax.ShapeDtypeStruct((M, N), out_dtype),
        grid_spec=pltpu.PrefetchScalarGridSpec(
            num_scalar_prefetch=0,
            grid=grid,
            in_specs=[
                pl.BlockSpec((tm, tk), lambda i, j, k: (i, k)),   # x
                pl.BlockSpec((tk, tn), lambda i, j, k: (k, j)),   # W.T  (K, N)
                pl.BlockSpec((1, tn), lambda i, j, k: (0, j)),    # bias
            ],
            out_specs=pl.BlockSpec((tm, tn), lambda i, j, k: (i, j)),
            scratch_shapes=scratch_shapes,
        ),
        compiler_params=pltpu.CompilerParams(
            dimension_semantics=("parallel", "parallel", "arbitrary"),
            vmem_limit_bytes=vmem_limit),
        cost_estimate=cost,
    )(x_p, w_p, b_p)

    return out_p[:B, :F_out]


def _reference(x, weight, bias, *, leak=0.0, sub=0.0, maxv=None):
    y = jnp.dot(x, weight.T, precision=lax.Precision.HIGHEST) + bias
    if leak is not None and leak != 0.0:
        y = jnp.where(y >= 0, y, y * leak)
    else:
        y = jnp.maximum(y, 0.0)
    if sub is not None and sub != 0.0:
        y = y - sub
    if maxv is not None:
        y = jnp.minimum(y, maxv)
    return y


if __name__ == "__main__":
    key = jax.random.PRNGKey(0)

    # Small shape matching LinLayer(feat_in=32, feat_out=16) defaults.
    B, F_in, F_out = 8, 32, 16
    kx, kw, kb = jax.random.split(key, 3)
    x = jax.random.normal(kx, (B, F_in), dtype=jnp.float32)
    bound = 1.0 / (F_in ** 0.5)
    weight = jax.random.uniform(kw, (F_out, F_in), jnp.float32, -bound, bound)
    bias = jax.random.uniform(kb, (F_out,), jnp.float32, -bound, bound)

    # Defaults: leak=0.0, sub=0.0, maxv=None (plain ReLU epilogue).
    out = jax.block_until_ready(lin_layer(x, weight, bias))
    ref = _reference(x, weight, bias)
    assert out.shape == (B, F_out)
    assert jnp.allclose(out, ref, atol=1e-5, rtol=1e-5)

    # Full GeneralRelu epilogue (leaky + sub + clamp_max).
    out2 = jax.block_until_ready(
        lin_layer(x, weight, bias, leak=0.1, sub=0.4, maxv=6.0))
    ref2 = _reference(x, weight, bias, leak=0.1, sub=0.4, maxv=6.0)
    assert jnp.allclose(out2, ref2, atol=1e-5, rtol=1e-5)

    # bf16 MXU path (f32 accumulation/epilogue) -> looser tolerance expected.
    out_bf16 = jax.block_until_ready(
        lin_layer(x, weight, bias, mxu_dtype=jnp.bfloat16))
    assert jnp.allclose(out_bf16, ref, atol=2e-2, rtol=2e-2)

    # Multi-tile grid check: exercises i/j/k tiling, accumulate-in-output
    # carry across k, weight pre-transpose and zero-padding of all dims.
    B2, F_in2, F_out2 = 192, 640, 384
    k2x, k2w, k2b = jax.random.split(jax.random.PRNGKey(1), 3)
    x2 = jax.random.normal(k2x, (B2, F_in2), dtype=jnp.float32)
    bound2 = 1.0 / (F_in2 ** 0.5)
    w2 = jax.random.uniform(k2w, (F_out2, F_in2), jnp.float32, -bound2, bound2)
    b2 = jax.random.uniform(k2b, (F_out2,), jnp.float32, -bound2, bound2)
    out3 = jax.block_until_ready(lin_layer(x2, w2, b2, tm=128, tn=128, tk=256))
    ref3 = _reference(x2, w2, b2)
    assert out3.shape == (B2, F_out2)
    assert jnp.allclose(out3, ref3, atol=5e-4, rtol=5e-4)

    print("KERNEL_OK")
</pallas_src>

<mosaic_0001>
module attributes {stable_mosaic.version = 11 : i64} {
  func.func @lin_layer_kernel(%arg0: i32, %arg1: i32, %arg2: i32, %arg3: memref<8x128xf32, #tpu.memory_space<vmem>>, %arg4: memref<128x128xf32, #tpu.memory_space<vmem>>, %arg5: memref<1x128xf32, #tpu.memory_space<vmem>>, %arg6: memref<8x128xf32, #tpu.memory_space<vmem>>) attributes {dimension_semantics = [#tpu.dimension_semantics<parallel>, #tpu.dimension_semantics<parallel>, #tpu.dimension_semantics<arbitrary>], iteration_bounds = array<i64: 1, 1, 1>, scalar_prefetch = 0 : i64, scratch_operands = 0 : i64, tpu.core_type = #tpu.core_type<tc>, window_params = [{transform_indices = @transform_0, window_bounds = array<i64: 8, 128>}, {transform_indices = @transform_1, window_bounds = array<i64: 128, 128>}, {transform_indices = @transform_2, window_bounds = array<i64: 1, 128>}, {transform_indices = @transform_3, window_bounds = array<i64: 8, 128>}]} {
    %c0_i32 = arith.constant 0 : i32
    %0 = arith.cmpi eq, %arg2, %c0_i32 : i32
    %1 = arith.extui %0 : i1 to i32
    %c0_i32_0 = arith.constant 0 : i32
    %2 = arith.cmpi ne, %1, %c0_i32_0 : i32
    scf.if %2 {
      %c0_10 = arith.constant 0 : index
      %c0_11 = arith.constant 0 : index
      %12 = vector.load %arg5[%c0_10, %c0_11] : memref<1x128xf32, #tpu.memory_space<vmem>>, vector<1x128xf32>
      %13 = vector.shape_cast %12 : vector<1x128xf32> to vector<1x128xf32>
      %14 = vector.broadcast %13 : vector<1x128xf32> to vector<8x128xf32>
      %c0_12 = arith.constant 0 : index
      %c0_13 = arith.constant 0 : index
      %15 = vector.load %arg6[%c0_12, %c0_13] : memref<8x128xf32, #tpu.memory_space<vmem>>, vector<8x128xf32>
      tpu.vector_store %arg6[%c0_12, %c0_13], %14 {strides = array<i32>} : memref<8x128xf32, #tpu.memory_space<vmem>>, vector<8x128xf32>,
    } else {
    }
    %c0 = arith.constant 0 : index
    %c0_1 = arith.constant 0 : index
    %3 = vector.load %arg6[%c0, %c0_1] : memref<8x128xf32, #tpu.memory_space<vmem>>, vector<8x128xf32>
    %c0_2 = arith.constant 0 : index
    %c0_3 = arith.constant 0 : index
    %4 = vector.load %arg3[%c0_2, %c0_3] : memref<8x128xf32, #tpu.memory_space<vmem>>, vector<8x128xf32>
    %c0_4 = arith.constant 0 : index
    %c0_5 = arith.constant 0 : index
    %5 = vector.load %arg4[%c0_4, %c0_5] : memref<128x128xf32, #tpu.memory_space<vmem>>, vector<128x128xf32>
    %cst = arith.constant dense<0.000000e+00> : vector<8x128xf32>
    %6 = tpu.matmul %4, %5, %cst {dimension_numbers = #tpu.dot_dimension_numbers<[1], [0], [0], [1], [0, 0, 1, 1], [], []>} : vector<8x128xf32>, vector<128x128xf32>, vector<8x128xf32> -> vector<8x128xf32>
    %7 = arith.addf %3, %6 : vector<8x128xf32>
    %c0_6 = arith.constant 0 : index
    %c0_7 = arith.constant 0 : index
    %8 = vector.load %arg6[%c0_6, %c0_7] : memref<8x128xf32, #tpu.memory_space<vmem>>, vector<8x128xf32>
    tpu.vector_store %arg6[%c0_6, %c0_7], %7 {strides = array<i32>} : memref<8x128xf32, #tpu.memory_space<vmem>>, vector<8x128xf32>,
    %c0_i32_8 = arith.constant 0 : i32
    %9 = arith.cmpi eq, %arg2, %c0_i32_8 : i32
    %10 = arith.extui %9 : i1 to i32
    %c0_i32_9 = arith.constant 0 : i32
    %11 = arith.cmpi ne, %10, %c0_i32_9 : i32
    scf.if %11 {
      %c0_10 = arith.constant 0 : index
      %c0_11 = arith.constant 0 : index
      %12 = vector.load %arg6[%c0_10, %c0_11] : memref<8x128xf32, #tpu.memory_space<vmem>>, vector<8x128xf32>
      %cst_12 = arith.constant 0.000000e+00 : f32
      %13 = vector.broadcast %cst_12 : f32 to vector<8x128xf32>
      %14 = arith.maximumf %12, %13 : vector<8x128xf32>
      %c0_13 = arith.constant 0 : index
      %c0_14 = arith.constant 0 : index
      %15 = vector.load %arg6[%c0_13, %c0_14] : memref<8x128xf32, #tpu.memory_space<vmem>>, vector<8x128xf32>
      tpu.vector_store %arg6[%c0_13, %c0_14], %14 {strides = array<i32>} : memref<8x128xf32, #tpu.memory_space<vmem>>, vector<8x128xf32>,
    } else {
    }
    return
  }
  func.func @transform_0(%arg0: i32, %arg1: i32, %arg2: i32) -> (i32, i32) {
    %c0_i32 = arith.constant 0 : i32
    return %arg0, %arg2 : i32, i32
  }
  func.func @transform_1(%arg0: i32, %arg1: i32, %arg2: i32) -> (i32, i32) {
    %c0_i32 = arith.constant 0 : i32
    return %arg2, %arg1 : i32, i32
  }
  func.func @transform_2(%arg0: i32, %arg1: i32, %arg2: i32) -> (i32, i32) {
    %c0_i32 = arith.constant 0 : i32
    %c0_i32_0 = arith.constant 0 : i32
    return %c0_i32, %arg1 : i32, i32
  }
  func.func @transform_3(%arg0: i32, %arg1: i32, %arg2: i32) -> (i32, i32) {
    %c0_i32 = arith.constant 0 : i32
    return %arg0, %arg1 : i32, i32
  }
}

</mosaic_0001>

<llo_original>
// kernel: tpu_custom_call.1
$region0: #{tpu_custom_call.1}
  #allocation0 [shape = 'u32[]', space=smem, size = 0x4, offset = 0x4, fixed_abs, tag = 'smem constant byte address 0x4 - core index']
  #allocation1 [shape = 'u32[72,128]{1,0:T(1,128)}', space=vmem, size = 0x9000, scoped, tag = 'internal scratch']
  %s0 = inlined_call_operand.hbm [shape: f32[8,128], index: 0, kind: input, shape index: {}]
  %s1 = inlined_call_operand.hbm [shape: f32[128,128], index: 1, kind: input, shape index: {}]
  %s2 = inlined_call_operand.vmem [shape: f32[1,128], index: 2, kind: input, shape index: {}]
  %s3 = inlined_call_operand.hbm [shape: f32[8,128], index: 3, kind: output, shape index: {}]
  %s4 = sld [smem:[#allocation0]]
  $region38: #{tpu_custom_call.1} parent=0
    _
  %s6 = ssub.s32 1, %s4
  %s7 = scalar_select 0, %s6, %s4
  $region1: #{tpu_custom_call.1} parent=0
    #allocation2 [shape = 'u8[4096]{0}', space=vmem, size = 0x1000, scoped, tag = 'input window, operand 0, single buffered']
    #allocation3 [shape = 's32[1]{0}', space=sflag, size = 0x4, scoped, tag = 'scoped memory for tpu_custom_call.1']
    #allocation4 [shape = 's32[1]{0}', space=sflag, size = 0x4, scoped, tag = 'scoped memory for tpu_custom_call.1']
    #allocation5 [shape = 'u8[65536]{0}', space=vmem, size = 0x10000, scoped, tag = 'input window, operand 1, single buffered']
    #allocation6 [shape = 's32[1]{0}', space=sflag, size = 0x4, scoped, tag = 'scoped memory for tpu_custom_call.1']
    #allocation7 [shape = 'u8[4096]{0}', space=vmem, size = 0x1000, scoped, tag = 'output window, operand 0, single buffered']
    %8 = vsyncpa [#allocation3], 0
    %9 = vsyncpa [#allocation6], 0
    %10 = vsyncpa [#allocation4], 0
    // Predicated region
    $region2: #{tpu_custom_call.1} parent=1 // pred_check
      _
    $region3: #{tpu_custom_call.1} parent=1 // pred_check_branch
      %12 = sbr.rel (0) target = $region5
    $region4: #{tpu_custom_call.1} parent=1 // pred_region
      %14 = vsyncadd [#allocation3], 0
      %s16 = sshll.u32 %s0, 4
      %s17 = int_to_ptr.hbm [resolvable:$true] %s16
      %s18 = sshll.u32 [#allocation2], 4
      %s19 = int_to_ptr.vmem [resolvable:$true] %s18
      %21 = dma.hbm_to_vmem [thread:$0]  %s17, 128, %s19, [#allocation3]
    $region5: #{tpu_custom_call.1} parent=1 // pred_fallthru
      _
    // Predicated region
    $region6: #{tpu_custom_call.1} parent=1 // pred_check
      _
    $region7: #{tpu_custom_call.1} parent=1 // pred_check_branch
      %23 = sbr.rel (0) target = $region9
    $region8: #{tpu_custom_call.1} parent=1 // pred_region
      %25 = vsyncadd [#allocation6], 0
      %s26 = sshll.u32 %s1, 4
      %s27 = int_to_ptr.hbm [resolvable:$true] %s26
      %s28 = sshll.u32 [#allocation5], 4
      %s29 = int_to_ptr.vmem [resolvable:$true] %s28
      %34 = dma.hbm_to_vmem [thread:$0]  %s27, 2048, %s29, [#allocation6], 128, 128, 8
    $region9: #{tpu_custom_call.1} parent=1 // pred_fallthru
      _
    // Predicated region
    $region10: #{tpu_custom_call.1} parent=1 // pred_check
      _
    $region11: #{tpu_custom_call.1} parent=1 // pred_check_branch
      %36 = sbr.rel (0) target = $region13
    $region12: #{tpu_custom_call.1} parent=1 // pred_region
      _
    $region13: #{tpu_custom_call.1} parent=1 // pred_fallthru
      _
    // Predicated region
    $region14: #{tpu_custom_call.1} parent=1 // pred_check
      _
    $region15: #{tpu_custom_call.1} parent=1 // pred_check_branch
      %38 = sbr.rel (0) target = $region17
    $region16: #{tpu_custom_call.1} parent=1 // pred_region
      %40 = dma.done [#allocation3], 128
    $region17: #{tpu_custom_call.1} parent=1 // pred_fallthru
      _
    // Predicated region
    $region18: #{tpu_custom_call.1} parent=1 // pred_check
      _
    $region19: #{tpu_custom_call.1} parent=1 // pred_check_branch
      %42 = sbr.rel (0) target = $region21
    $region20: #{tpu_custom_call.1} parent=1 // pred_region
      %44 = dma.done [#allocation6], 2048
    $region21: #{tpu_custom_call.1} parent=1 // pred_fallthru
      _
    %p45 = scmp.eq.s32.totalorder 0, 0
    // Predicated region
    $region22: #{tpu_custom_call.1} parent=1 // pred_check
      %p46 = pneg %p45
    $region23: #{tpu_custom_call.1} parent=1 // pred_check_branch
      %48 = sbr.rel (%p46) target = $region25
    $region24: #{tpu_custom_call.1} parent=1 // pred_region
      %v49 = vld [vmem:[%s2] sm:$0x1]
      %v51 = vperm.slane %v49, 0
      %53 = vst [vmem:[#allocation7] sm:$0xff] %v51
    $region25: #{tpu_custom_call.1} parent=1 // pred_fallthru
      _
    %v54 = vld [vmem:[#allocation7] sm:$0xff]
    %v55 = vld [vmem:[#allocation2] sm:$0xff]
    %v56 = vld [vmem:[#allocation5] sm:$0xff]
    %v57 = vld [vmem:[#allocation5 + $0x8] sm:$0xff]
    %v58 = vld [vmem:[#allocation5 + $0x10] sm:$0xff]
    %v59 = vld [vmem:[#allocation5 + $0x18] sm:$0xff]
    %v60 = vld [vmem:[#allocation5 + $0x20] sm:$0xff]
    %v61 = vld [vmem:[#allocation5 + $0x28] sm:$0xff]
    %v62 = vld [vmem:[#allocation5 + $0x30] sm:$0xff]
    %v63 = vld [vmem:[#allocation5 + $0x38] sm:$0xff]
    %v64 = vld [vmem:[#allocation5 + $0x40] sm:$0xff]
    %v65 = vld [vmem:[#allocation5 + $0x48] sm:$0xff]
    %v66 = vld [vmem:[#allocation5 + $0x50] sm:$0xff]
    %v67 = vld [vmem:[#allocation5 + $0x58] sm:$0xff]
    %v68 = vld [vmem:[#allocation5 + $0x60] sm:$0xff]
    %v69 = vld [vmem:[#allocation5 + $0x68] sm:$0xff]
    %v70 = vld [vmem:[#allocation5 + $0x70] sm:$0xff]
    %v71 = vld [vmem:[#allocation5 + $0x78] sm:$0xff]
    %72 = vmatpush.msra.mxu0 %v71
    %73 = vmatpush.msra.mxu0 %v70
    %74 = vmatpush.msra.mxu0 %v69
    %75 = vmatpush.msra.mxu0 %v68
    %76 = vmatpush.msra.mxu0 %v67
    %77 = vmatpush.msra.mxu0 %v66
    %78 = vmatpush.msra.mxu0 %v65
    %79 = vmatpush.msra.mxu0 %v64
    %80 = vmatpush.msra.mxu0 %v63
    %81 = vmatpush.msra.mxu0 %v62
    %82 = vmatpush.msra.mxu0 %v61
    %83 = vmatpush.msra.mxu0 %v60
    %84 = vmatpush.msra.mxu0 %v59
    %85 = vmatpush.msra.mxu0 %v58
    %86 = vmatpush.msra.mxu0 %v57
    %87 = vmatpush.msra.mxu0 %v56
    %88 = vmatmul.f32.gmra.mxu0 %v55
    %v89 = vpop.f32.mrf.mxu0
    %v90 = vadd.f32 0.0, %v89
    %91 = vdwg.mxu0
    %v92 = vadd.f32 %v54, %v90
    %93 = vst [vmem:[#allocation7] sm:$0xff] %v92
    // Predicated region
    $region26: #{tpu_custom_call.1} parent=1 // pred_check
      %p94 = pneg %p45
    $region27: #{tpu_custom_call.1} parent=1 // pred_check_branch
      %96 = sbr.rel (%p94) target = $region29
    $region28: #{tpu_custom_call.1} parent=1 // pred_region
      %v97 = vld [vmem:[#allocation7] sm:$0xff]
      %v98 = vmax.f32 %v97, 0.0
      %99 = vst [vmem:[#allocation7] sm:$0xff] %v98
    $region29: #{tpu_custom_call.1} parent=1 // pred_fallthru
      _
    // Predicated region
    $region30: #{tpu_custom_call.1} parent=1 // pred_check
      _
    $region31: #{tpu_custom_call.1} parent=1 // pred_check_branch
      %101 = sbr.rel (0) target = $region33
    $region32: #{tpu_custom_call.1} parent=1 // pred_region
      %103 = vsyncadd [#allocation4], 0
      %s105 = sshll.u32 [#allocation7], 4
      %s106 = int_to_ptr.vmem [resolvable:$true] %s105
      %s107 = sshll.u32 %s3, 4
      %s108 = int_to_ptr.hbm [resolvable:$true] %s107
      %110 = dma.vmem_to_hbm [thread:$0]  %s106, 128, %s108, [#allocation4]
    $region33: #{tpu_custom_call.1} parent=1 // pred_fallthru
      _
    // Predicated region
    $region34: #{tpu_custom_call.1} parent=1 // pred_check
      _
    $region35: #{tpu_custom_call.1} parent=1 // pred_check_branch
      %112 = sbr.rel (0) target = $region37
    $region36: #{tpu_custom_call.1} parent=1 // pred_region
      %114 = dma.done [#allocation4], 128
    $region37: #{tpu_custom_call.1} parent=1 // pred_fallthru
      _
    %115 = vsyncpa [#allocation3], 1
    %116 = vsyncpa [#allocation6], 1
    %117 = vsyncpa [#allocation4], 1

</llo_original>
